<compile_context>
chip_gen: v7x
topology: tpu7x:2x2x1
jax: 0.10.0
libtpu: 0.0.40
codegen_flags: <defaults>
</compile_context>

<pallas_src>
import jax
import jax.numpy as jnp
from jax import lax
from jax.experimental import pallas as pl
from jax.experimental.pallas import tpu as pltpu

EPS = 1e-12  # F.normalize default eps


def _euclid_sim_kernel(x1_ref, x2_ref, w_ref, b_ref, out_ref, acc_ref):
    # x1_ref, x2_ref: (bm, tk) f32   -- raw activations (cast to bf16 here)
    # w_ref         : (tk, H)  bf16  -- encoder weight chunk
    # b_ref         : (1, H)   f32   -- encoder bias (resident)
    # out_ref       : (bm, H)        -- similarity output tile
    # acc_ref       : (2, bm, H) f32 -- matmul accumulator (both encodings)
    k = pl.program_id(1)
    nk = pl.num_programs(1)

    @pl.when(k == 0)
    def _():
        acc_ref[...] = jnp.zeros_like(acc_ref)

    # Cast activations to the matmul dtype in-kernel; f32 accumulation on MXU.
    mm_dtype = w_ref.dtype
    acc_ref[0] += jnp.dot(x1_ref[...].astype(mm_dtype), w_ref[...],
                          preferred_element_type=jnp.float32)
    acc_ref[1] += jnp.dot(x2_ref[...].astype(mm_dtype), w_ref[...],
                          preferred_element_type=jnp.float32)

    @pl.when(k == nk - 1)
    def _():
        h = acc_ref[...] + b_ref[...]                      # (2, bm, H)

        # F.normalize(v, p=2, dim=1) == v / max(||v||, eps)
        #                            == v * rsqrt(max(sum(v*v), eps^2))
        # Normalize both encodings in a single reduction / broadcast.
        ss = jnp.sum(h * h, axis=-1, keepdims=True)        # (2, bm, 1)
        hn = h * lax.rsqrt(jnp.maximum(ss, EPS * EPS))

        d = hn[0] - hn[1]                                  # (bm, H)
        ssd = jnp.sum(d * d, axis=-1, keepdims=True)
        dn = d * lax.rsqrt(jnp.maximum(ssd, EPS * EPS))

        denom = 1.0 + dn
        # EUP approximate reciprocal + one Newton step -> ~f32 accuracy,
        # keeps the divide off the saturated VPU slot.
        r = pl.reciprocal(denom, approx=True)
        r = r * (2.0 - denom * r)
        out_ref[...] = r.astype(out_ref.dtype)


def _round_up(x, m):
    return ((x + m - 1) // m) * m


def _tpu_topology():
    """(physical VMEM bytes, TensorCores per chip) with safe fallbacks."""
    vmem = 64 * 1024 * 1024      # conservative (v7x-sized) fallback
    cores = 1
    try:
        info = pltpu.get_tpu_info()
        vmem = int(getattr(info, "vmem_capacity_bytes", vmem))
        for name in ("num_cores", "core_count", "tensorcore_count"):
            v = getattr(info, name, None)
            if isinstance(v, int) and v > 0:
                cores = v
                break
    except Exception:
        pass
    return vmem, cores


def _choose_bm(batch, bm_hint, num_cores):
    """Batch tile: multiple of 16 (bf16 sublane pack), large, but keeping
    >= 2 grid steps per TensorCore when the batch permits."""
    if batch <= 16:
        return batch
    per_core_cap = _round_up(max(pl.cdiv(batch, 2 * max(num_cores, 1)), 16), 16)
    return max(16, min(_round_up(bm_hint, 16), per_core_cap))


def _vmem_estimate(bm, tk, H, nk, out_itemsize, w_itemsize):
    in_bytes = 2 * (2 * bm * tk * 4)                 # x1 + x2, double-buffered, f32
    w_bytes = (1 if nk == 1 else 2) * tk * H * w_itemsize
    b_bytes = H * 4                                  # single-buffered bias
    out_bytes = 2 * bm * H * out_itemsize            # double-buffered output tile
    acc_bytes = 2 * bm * H * 4                       # (2, bm, H) f32 scratch
    return in_bytes + w_bytes + b_bytes + out_bytes + acc_bytes


def _choose_tk(D, bm, H, budget, out_itemsize, w_itemsize):
    """Largest K tile (divisor of D, multiple of 128) whose working set fits."""
    def est(tk, nk):
        return int(1.25 * _vmem_estimate(bm, tk, H, nk, out_itemsize, w_itemsize))

    if est(D, 1) <= budget:
        return D
    cands = [t for t in range(128, D, 128) if D % t == 0]
    for tk in sorted(cands, reverse=True):
        if est(tk, 2) <= budget:
            return tk
    return cands[0] if cands else D     # best effort


def euclid_sim_sts_predict(x1, x2, w, b, *, bm=256, tk=None,
                           matmul_dtype=jnp.bfloat16,
                           out_dtype=jnp.float32):
    """x1, x2: [B, D] f32; w: [D, H]; b: [H]. Returns euclid_sim: [B, H].

    `out_dtype=jnp.bfloat16` halves output HBM traffic if downstream allows.
    """
    B, D = x1.shape
    H = w.shape[1]

    vmem_cap, num_cores = _tpu_topology()
    budget = int(0.80 * vmem_cap)        # ~20% headroom for Mosaic scratch

    bm = _choose_bm(B, bm, num_cores)

    w_isz = jnp.dtype(matmul_dtype).itemsize
    o_isz = jnp.dtype(out_dtype).itemsize

    if tk is None:
        tk = _choose_tk(D, bm, H, budget, o_isz, w_isz)
    if D % tk != 0:
        tk = D                           # never pad the contraction axis
    nk = D // tk
    nb = pl.cdiv(B, bm)

    vmem_need = int(1.25 * _vmem_estimate(bm, tk, H, nk, o_isz, w_isz))
    vmem_limit = int(min(budget, max(vmem_need, 32 * 1024 * 1024)))

    wq = w.astype(matmul_dtype)               # one-time parameter cast
    b2d = b.reshape(1, H).astype(jnp.float32)

    # Resident (constant-index) blocks are single-buffered; a K-tiled weight
    # keeps the default double buffer so its DMA overlaps compute.
    w_mode = pl.Buffered(1) if nk == 1 else pl.Buffered(2)

    return pl.pallas_call(
        _euclid_sim_kernel,
        out_shape=jax.ShapeDtypeStruct((B, H), out_dtype),
        grid_spec=pltpu.PrefetchScalarGridSpec(
            num_scalar_prefetch=0,
            grid=(nb, nk),
            in_specs=[
                pl.BlockSpec((bm, tk), lambda i, k: (i, k)),      # x1 (f32)
                pl.BlockSpec((bm, tk), lambda i, k: (i, k)),      # x2 (f32)
                pl.BlockSpec((tk, H), lambda i, k: (k, 0),
                             pipeline_mode=w_mode),               # weight
                pl.BlockSpec((1, H), lambda i, k: (0, 0),
                             pipeline_mode=pl.Buffered(1)),       # bias
            ],
            out_specs=pl.BlockSpec((bm, H), lambda i, k: (i, 0)),
            scratch_shapes=[pltpu.VMEM((2, bm, H), jnp.float32)],
        ),
        compiler_params=pltpu.CompilerParams(
            dimension_semantics=("parallel", "arbitrary"),
            vmem_limit_bytes=vmem_limit,
        ),
    )(x1.astype(jnp.float32), x2.astype(jnp.float32), wq, b2d)


def _reference(x1, x2, w, b, matmul_dtype=jnp.bfloat16):
    """Pure-JAX reference matching the kernel's numerics (bf16 matmul inputs,
    f32 accumulation, sqrt/divide normalize, exact reciprocal)."""
    def l2n(x):
        n = jnp.sqrt(jnp.sum(x * x, axis=1, keepdims=True))
        return x / jnp.maximum(n, EPS)

    def enc(x):
        return jnp.dot(x.astype(matmul_dtype), w.astype(matmul_dtype),
                       preferred_element_type=jnp.float32) + b

    h1 = l2n(enc(x1))
    h2 = l2n(enc(x2))
    d = l2n(h1 - h2)
    return 1.0 / (1.0 + d)


if __name__ == "__main__":
    key = jax.random.PRNGKey(0)
    k1, k2, kw, kb = jax.random.split(key, 4)

    # Small, lane/sublane-aligned shapes (D multiple of 256 fills the
    # v6e/v7x MXU contraction depth).
    B, D, H = 64, 256, 256
    x1 = jax.random.normal(k1, (B, D), dtype=jnp.float32)
    x2 = jax.random.normal(k2, (B, D), dtype=jnp.float32)

    # Deterministic encoder parameters (synthetic Linear encoder).
    w = jax.random.normal(kw, (D, H), dtype=jnp.float32) * (1.0 / jnp.sqrt(D))
    b = jax.random.normal(kb, (H,), dtype=jnp.float32) * 0.01

    ref = _reference(x1, x2, w, b)

    # 1) Resident-weight path (single K block).
    out = jax.block_until_ready(euclid_sim_sts_predict(x1, x2, w, b))
    assert out.shape == (B, H)
    max_err = float(jnp.max(jnp.abs(out - ref)))
    assert jnp.allclose(out, ref, atol=2e-5, rtol=2e-5), max_err

    # 2) K-tiled accumulation path (forced with tk=128 -> 2 K steps).
    out_kt = jax.block_until_ready(
        euclid_sim_sts_predict(x1, x2, w, b, tk=128))
    max_err_kt = float(jnp.max(jnp.abs(out_kt - ref)))
    assert jnp.allclose(out_kt, ref, atol=2e-5, rtol=2e-5), max_err_kt

    print("KERNEL_OK")
</pallas_src>

<mosaic_0001>
module attributes {stable_mosaic.version = 11 : i64} {
  func.func @_euclid_sim_kernel(%arg0: i32, %arg1: i32, %arg2: memref<32x256xf32, #tpu.memory_space<vmem>>, %arg3: memref<32x256xf32, #tpu.memory_space<vmem>>, %arg4: memref<256x256xbf16, #tpu.memory_space<vmem>>, %arg5: memref<1x256xf32, #tpu.memory_space<vmem>>, %arg6: memref<32x256xf32, #tpu.memory_space<vmem>>, %arg7: memref<2x32x256xf32, #tpu.memory_space<vmem>>) attributes {dimension_semantics = [#tpu.dimension_semantics<parallel>, #tpu.dimension_semantics<arbitrary>], iteration_bounds = array<i64: 2, 1>, scalar_prefetch = 0 : i64, scratch_operands = 1 : i64, tpu.core_type = #tpu.core_type<tc>, window_params = [{transform_indices = @transform_0, window_bounds = array<i64: 32, 256>}, {transform_indices = @transform_1, window_bounds = array<i64: 32, 256>}, {pipeline_mode = #tpu.pipeline_mode<synchronous>, transform_indices = @transform_2, window_bounds = array<i64: 256, 256>}, {pipeline_mode = #tpu.pipeline_mode<synchronous>, transform_indices = @transform_3, window_bounds = array<i64: 1, 256>}, {transform_indices = @transform_4, window_bounds = array<i64: 32, 256>}]} {
    %c0_i32 = arith.constant 0 : i32
    %0 = arith.cmpi eq, %arg1, %c0_i32 : i32
    %1 = arith.extui %0 : i1 to i32
    %c0_i32_0 = arith.constant 0 : i32
    %2 = arith.cmpi ne, %1, %c0_i32_0 : i32
    scf.if %2 {
      %cst_22 = arith.constant 0.000000e+00 : f32
      %26 = vector.broadcast %cst_22 : f32 to vector<2x32x256xf32>
      %c0_23 = arith.constant 0 : index
      %c0_24 = arith.constant 0 : index
      %c0_25 = arith.constant 0 : index
      %27 = vector.load %arg7[%c0_23, %c0_24, %c0_25] : memref<2x32x256xf32, #tpu.memory_space<vmem>>, vector<2x32x256xf32>
      tpu.vector_store %arg7[%c0_23, %c0_24, %c0_25], %26 {strides = array<i32>} : memref<2x32x256xf32, #tpu.memory_space<vmem>>, vector<2x32x256xf32>,
    } else {
    }
    %c0 = arith.constant 0 : index
    %c0_1 = arith.constant 0 : index
    %c0_2 = arith.constant 0 : index
    %3 = vector.load %arg7[%c0, %c0_1, %c0_2] : memref<2x32x256xf32, #tpu.memory_space<vmem>>, vector<1x32x256xf32>
    %4 = vector.shape_cast %3 : vector<1x32x256xf32> to vector<32x256xf32>
    %c0_3 = arith.constant 0 : index
    %c0_4 = arith.constant 0 : index
    %5 = vector.load %arg2[%c0_3, %c0_4] : memref<32x256xf32, #tpu.memory_space<vmem>>, vector<32x256xf32>
    %6 = arith.truncf %5 : vector<32x256xf32> to vector<32x256xbf16>
    %c0_5 = arith.constant 0 : index
    %c0_6 = arith.constant 0 : index
    %7 = vector.load %arg4[%c0_5, %c0_6] : memref<256x256xbf16, #tpu.memory_space<vmem>>, vector<256x256xbf16>
    %cst = arith.constant dense<0.000000e+00> : vector<32x256xf32>
    %8 = tpu.matmul %6, %7, %cst {dimension_numbers = #tpu.dot_dimension_numbers<[1], [0], [0], [1], [0, 0, 1, 1], [], []>} : vector<32x256xbf16>, vector<256x256xbf16>, vector<32x256xf32> -> vector<32x256xf32>
    %9 = arith.addf %4, %8 : vector<32x256xf32>
    %c0_7 = arith.constant 0 : index
    %c0_8 = arith.constant 0 : index
    %c0_9 = arith.constant 0 : index
    %10 = vector.load %arg7[%c0_7, %c0_8, %c0_9] : memref<2x32x256xf32, #tpu.memory_space<vmem>>, vector<1x32x256xf32>
    %11 = vector.shape_cast %10 : vector<1x32x256xf32> to vector<32x256xf32>
    %12 = vector.shape_cast %9 : vector<32x256xf32> to vector<1x32x256xf32>
    tpu.vector_store %arg7[%c0_7, %c0_8, %c0_9], %12 {strides = array<i32>} : memref<2x32x256xf32, #tpu.memory_space<vmem>>, vector<1x32x256xf32>,
    %c1 = arith.constant 1 : index
    %c0_10 = arith.constant 0 : index
    %c0_11 = arith.constant 0 : index
    %13 = vector.load %arg7[%c1, %c0_10, %c0_11] : memref<2x32x256xf32, #tpu.memory_space<vmem>>, vector<1x32x256xf32>
    %14 = vector.shape_cast %13 : vector<1x32x256xf32> to vector<32x256xf32>
    %c0_12 = arith.constant 0 : index
    %c0_13 = arith.constant 0 : index
    %15 = vector.load %arg3[%c0_12, %c0_13] : memref<32x256xf32, #tpu.memory_space<vmem>>, vector<32x256xf32>
    %16 = arith.truncf %15 : vector<32x256xf32> to vector<32x256xbf16>
    %c0_14 = arith.constant 0 : index
    %c0_15 = arith.constant 0 : index
    %17 = vector.load %arg4[%c0_14, %c0_15] : memref<256x256xbf16, #tpu.memory_space<vmem>>, vector<256x256xbf16>
    %cst_16 = arith.constant dense<0.000000e+00> : vector<32x256xf32>
    %18 = tpu.matmul %16, %17, %cst_16 {dimension_numbers = #tpu.dot_dimension_numbers<[1], [0], [0], [1], [0, 0, 1, 1], [], []>} : vector<32x256xbf16>, vector<256x256xbf16>, vector<32x256xf32> -> vector<32x256xf32>
    %19 = arith.addf %14, %18 : vector<32x256xf32>
    %c1_17 = arith.constant 1 : index
    %c0_18 = arith.constant 0 : index
    %c0_19 = arith.constant 0 : index
    %20 = vector.load %arg7[%c1_17, %c0_18, %c0_19] : memref<2x32x256xf32, #tpu.memory_space<vmem>>, vector<1x32x256xf32>
    %21 = vector.shape_cast %20 : vector<1x32x256xf32> to vector<32x256xf32>
    %22 = vector.shape_cast %19 : vector<32x256xf32> to vector<1x32x256xf32>
    tpu.vector_store %arg7[%c1_17, %c0_18, %c0_19], %22 {strides = array<i32>} : memref<2x32x256xf32, #tpu.memory_space<vmem>>, vector<1x32x256xf32>,
    %c0_i32_20 = arith.constant 0 : i32
    %23 = arith.cmpi eq, %arg1, %c0_i32_20 : i32
    %24 = arith.extui %23 : i1 to i32
    %c0_i32_21 = arith.constant 0 : i32
    %25 = arith.cmpi ne, %24, %c0_i32_21 : i32
    scf.if %25 {
      %c0_22 = arith.constant 0 : index
      %c0_23 = arith.constant 0 : index
      %c0_24 = arith.constant 0 : index
      %26 = vector.load %arg7[%c0_22, %c0_23, %c0_24] : memref<2x32x256xf32, #tpu.memory_space<vmem>>, vector<2x32x256xf32>
      %c0_25 = arith.constant 0 : index
      %c0_26 = arith.constant 0 : index
      %27 = vector.load %arg5[%c0_25, %c0_26] : memref<1x256xf32, #tpu.memory_space<vmem>>, vector<1x256xf32>
      %28 = vector.shape_cast %27 : vector<1x256xf32> to vector<1x1x256xf32>
      %29 = vector.broadcast %28 : vector<1x1x256xf32> to vector<2x32x256xf32>
      %30 = arith.addf %26, %29 : vector<2x32x256xf32>
      %31 = arith.mulf %30, %30 : vector<2x32x256xf32>
      %cst_27 = arith.constant dense<0.000000e+00> : vector<2x32xf32>
      %32 = vector.multi_reduction <add>, %31, %cst_27 [2] : vector<2x32x256xf32> to vector<2x32xf32>
      %33 = vector.shape_cast %32 : vector<2x32xf32> to vector<2x32x1xf32>
      %cst_28 = arith.constant 1.000000e-24 : f32
      %34 = vector.broadcast %cst_28 : f32 to vector<2x32x1xf32>
      %35 = arith.maximumf %33, %34 : vector<2x32x1xf32>
      %36 = math.rsqrt %35 : vector<2x32x1xf32>
      %37 = vector.broadcast %36 : vector<2x32x1xf32> to vector<2x32x256xf32>
      %38 = arith.mulf %30, %37 : vector<2x32x256xf32>
      %39 = vector.extract_strided_slice %38 {offsets = [0, 0, 0], sizes = [1, 32, 256], strides = [1, 1, 1]} : vector<2x32x256xf32> to vector<1x32x256xf32>
      %40 = vector.shape_cast %39 : vector<1x32x256xf32> to vector<32x256xf32>
      %41 = vector.extract_strided_slice %38 {offsets = [1, 0, 0], sizes = [1, 32, 256], strides = [1, 1, 1]} : vector<2x32x256xf32> to vector<1x32x256xf32>
      %42 = vector.shape_cast %41 : vector<1x32x256xf32> to vector<32x256xf32>
      %43 = arith.subf %40, %42 : vector<32x256xf32>
      %44 = arith.mulf %43, %43 : vector<32x256xf32>
      %cst_29 = arith.constant dense<0.000000e+00> : vector<32xf32>
      %45 = vector.multi_reduction <add>, %44, %cst_29 [1] : vector<32x256xf32> to vector<32xf32>
      %46 = vector.shape_cast %45 : vector<32xf32> to vector<32x1xf32>
      %cst_30 = arith.constant 1.000000e-24 : f32
      %47 = vector.broadcast %cst_30 : f32 to vector<32x1xf32>
      %48 = arith.maximumf %46, %47 : vector<32x1xf32>
      %49 = math.rsqrt %48 : vector<32x1xf32>
      %50 = vector.broadcast %49 : vector<32x1xf32> to vector<32x256xf32>
      %51 = arith.mulf %43, %50 : vector<32x256xf32>
      %cst_31 = arith.constant 1.000000e+00 : f32
      %52 = vector.broadcast %cst_31 : f32 to vector<32x256xf32>
      %53 = arith.addf %52, %51 : vector<32x256xf32>
      %54 = tpu.reciprocal %53 {approx = true} : vector<32x256xf32> -> vector<32x256xf32>
      %55 = arith.mulf %53, %54 : vector<32x256xf32>
      %cst_32 = arith.constant 2.000000e+00 : f32
      %56 = vector.broadcast %cst_32 : f32 to vector<32x256xf32>
      %57 = arith.subf %56, %55 : vector<32x256xf32>
      %58 = arith.mulf %54, %57 : vector<32x256xf32>
      %c0_33 = arith.constant 0 : index
      %c0_34 = arith.constant 0 : index
      %59 = vector.load %arg6[%c0_33, %c0_34] : memref<32x256xf32, #tpu.memory_space<vmem>>, vector<32x256xf32>
      tpu.vector_store %arg6[%c0_33, %c0_34], %58 {strides = array<i32>} : memref<32x256xf32, #tpu.memory_space<vmem>>, vector<32x256xf32>,
    } else {
    }
    return
  }
  func.func @transform_0(%arg0: i32, %arg1: i32) -> (i32, i32) {
    %c0_i32 = arith.constant 0 : i32
    return %arg0, %arg1 : i32, i32
  }
  func.func @transform_1(%arg0: i32, %arg1: i32) -> (i32, i32) {
    %c0_i32 = arith.constant 0 : i32
    return %arg0, %arg1 : i32, i32
  }
  func.func @transform_2(%arg0: i32, %arg1: i32) -> (i32, i32) {
    %c0_i32 = arith.constant 0 : i32
    %c0_i32_0 = arith.constant 0 : i32
    return %arg1, %c0_i32 : i32, i32
  }
  func.func @transform_3(%arg0: i32, %arg1: i32) -> (i32, i32) {
    %c0_i32 = arith.constant 0 : i32
    %c0_i32_0 = arith.constant 0 : i32
    %c0_i32_1 = arith.constant 0 : i32
    return %c0_i32, %c0_i32_0 : i32, i32
  }
  func.func @transform_4(%arg0: i32, %arg1: i32) -> (i32, i32) {
    %c0_i32 = arith.constant 0 : i32
    %c0_i32_0 = arith.constant 0 : i32
    return %arg0, %c0_i32 : i32, i32
  }
}

</mosaic_0001>

<llo_original>
// kernel: tpu_custom_call.1
$region0: #{tpu_custom_call.1}
  #allocation0 [shape = 'u32[]', space=smem, size = 0x4, offset = 0x4, fixed_abs, tag = 'smem constant byte address 0x4 - core index']
  #allocation1 [shape = 'u32[144,128]{1,0:T(1,128)}', space=vmem, size = 0x12000, scoped, tag = 'internal scratch']
  #allocation2 [shape = 'f32[2,32,256]{2,1,0:T(8,128)}', space=vmem, size = 0x10000, scoped, tag = 'scratch operand']
  %s0 = inlined_call_operand.hbm [shape: f32[64,256], index: 0, kind: input, shape index: {}]
  %s1 = inlined_call_operand.hbm [shape: f32[64,256], index: 1, kind: input, shape index: {}]
  %s2 = inlined_call_operand.hbm [shape: bf16[256,256], index: 2, kind: input, shape index: {}]
  %s3 = inlined_call_operand.vmem [shape: f32[1,256], index: 3, kind: input, shape index: {}]
  %s4 = inlined_call_operand.hbm [shape: f32[64,256], index: 4, kind: output, shape index: {}]
  %s5 = sld [smem:[#allocation0]]
  $region69: #{tpu_custom_call.1} parent=0
    _
  %s7 = ssub.s32 1, %s5
  %s8 = scalar_select 0, %s7, %s5
  $region1: #{tpu_custom_call.1} parent=0
    #allocation3 [shape = 'u8[65536]{0}', space=vmem, size = 0x10000, scoped, tag = 'input window, operand 0']
    #allocation4 [shape = 's32[2]{0}', space=sflag, size = 0x8, scoped, tag = 'scoped memory for tpu_custom_call.1']
    #allocation5 [shape = 's32[2]{0}', space=sflag, size = 0x8, scoped, tag = 'scoped memory for tpu_custom_call.1']
    #allocation6 [shape = 'u8[65536]{0}', space=vmem, size = 0x10000, scoped, tag = 'input window, operand 1']
    #allocation7 [shape = 's32[2]{0}', space=sflag, size = 0x8, scoped, tag = 'scoped memory for tpu_custom_call.1']
    #allocation8 [shape = 'u8[131072]{0}', space=vmem, size = 0x20000, scoped, tag = 'input window, operand 2, single buffered']
    #allocation9 [shape = 'u8[65536]{0}', space=vmem, size = 0x10000, scoped, tag = 'output window, operand 0']
    %9 = vsyncpa [#allocation4], 0
    %s10 = scalar_lea.sflag [#allocation4], 1
    %11 = vsyncpa %s10, 0
    %12 = vsyncpa [#allocation7], 0
    %s13 = scalar_lea.sflag [#allocation7], 1
    %14 = vsyncpa %s13, 0
    %15 = vsyncpa [#allocation5], 0
    %s16 = scalar_lea.sflag [#allocation5], 1
    %17 = vsyncpa %s16, 0
    loop: start=0, step=1, limit=4
    $region2: #{tpu_custom_call.1} parent=1 // loop_pre_header
      _
    $region3: #{tpu_custom_call.1} parent=1 // loop_header
      %s19 = sphi 0, %s23
      %p20 = scmp.ge.s32.totalorder %s19, 4
      %s26 = sphi 0, %s38
      %s27 = sphi 0, %s34
      %s28 = sphi 0, %s26
      %s29 = sphi 0, %s27
      %s30 = sphi 0, %s28
      %s31 = sphi 0, %s29
      %s43 = sphi 0, %s45
      %s46 = sphi 0, %s43
      %s47 = sphi 0, %s46
      %s63 = sphi 0, %s47
      %s71 = sphi 0, %s73
      %s74 = sphi 0, %s71
      %s75 = sphi 0, %s74
      %s91 = sphi 0, %s75
      %s97 = sphi 0, %s99
      %s100 = sphi 0, %s97
      %s101 = sphi 0, %s100
      %s117 = sphi 0, %s101
      %s121 = sphi 0, %s121
      %s123 = sphi 0, %s121
      %s124 = sphi 0, %s123
      %s138 = sphi 0, %s124
      %s144 = sphi 0, %s146
      %s147 = sphi 0, %s144
      %s148 = sphi 0, %s147
      %s164 = sphi 0, %s148
    $region4: #{tpu_custom_call.1} parent=1 // loop_header_branch
      %22 = sbr.rel (%p20) target = $region8
    $region5: #{tpu_custom_call.1} parent=1 // loop_body
      %s24 = ssub.s32 %s19, 1
      %s25 = ssub.s32 %s19, 2
      %s32 = sadd.s32 1, %s27
      %p33 = scmp.ge.s32.totalorder %s32, 1
      %s34 = scalar_select %p33, 0, %s32
      %s35 = sadd.s32 1, %s26
      %s36 = scalar_select %p33, %s35, %s26
      %p37 = scmp.ge.s32.totalorder %s36, 2
      %s38 = scalar_select %p37, 0, %s36
      %s39 = ssub.s32 %s26, %s38
      %s40 = ssub.s32 %s27, %s34
      %s41 = sor.u32 %s39, %s40
      %p42 = scmp.eq.s32.totalorder %s41, 0
      %s44 = sadd.s32 %s43, 1
      %s45 = scalar_select %p42, %s43, %s44
      %p48 = pneg %p42
      %p49 = scmp.eq.s32.totalorder %s19, 1
      %p50 = por %p48, %p49
      %p51 = scmp.ne.s32.totalorder %s43, %s46
      %p52 = scmp.eq.s32.totalorder %s19, 0
      %p53 = por %p51, %p52
      %p54 = scmp.ne.s32.totalorder %s43, %s46
      %p55 = scmp.eq.s32.totalorder %s24, 1
      %p56 = por %p54, %p55
      %p57 = scmp.ne.s32.totalorder %s46, %s47
      %p58 = scmp.eq.s32.totalorder %s24, 0
      %p59 = por %p57, %p58
      %p60 = scmp.ne.s32.totalorder %s46, %s47
      %p61 = scmp.eq.s32.totalorder %s25, 1
      %p62 = por %p60, %p61
      %p64 = scmp.ne.s32.totalorder %s47, %s63
      %p65 = scmp.eq.s32.totalorder %s25, 0
      %p66 = por %p64, %p65
      %s67 = ssub.s32 %s26, %s38
      %s68 = ssub.s32 %s27, %s34
      %s69 = sor.u32 %s67, %s68
      %p70 = scmp.eq.s32.totalorder %s69, 0
      %s72 = sadd.s32 %s71, 1
      %s73 = scalar_select %p70, %s71, %s72
      %p76 = pneg %p70
      %p77 = scmp.eq.s32.totalorder %s19, 1
      %p78 = por %p76, %p77
      %p79 = scmp.ne.s32.totalorder %s71, %s74
      %p80 = scmp.eq.s32.totalorder %s19, 0
      %p81 = por %p79, %p80
      %p82 = scmp.ne.s32.totalorder %s71, %s74
      %p83 = scmp.eq.s32.totalorder %s24, 1
      %p84 = por %p82, %p83
      %p85 = scmp.ne.s32.totalorder %s74, %s75
      %p86 = scmp.eq.s32.totalorder %s24, 0
      %p87 = por %p85, %p86
      %p88 = scmp.ne.s32.totalorder %s74, %s75
      %p89 = scmp.eq.s32.totalorder %s25, 1
      %p90 = por %p88, %p89
      %p92 = scmp.ne.s32.totalorder %s75, %s91
      %p93 = scmp.eq.s32.totalorder %s25, 0
      %p94 = por %p92, %p93
      %s95 = ssub.s32 %s27, %s34
      %p96 = scmp.eq.s32.totalorder %s95, 0
      %s98 = sadd.s32 %s97, 1
      %s99 = scalar_select %p96, %s97, %s98
      %p102 = pneg %p96
      %p103 = scmp.eq.s32.totalorder %s19, 1
      %p104 = por %p102, %p103
      %p105 = scmp.ne.s32.totalorder %s97, %s100
      %p106 = scmp.eq.s32.totalorder %s19, 0
      %p107 = por %p105, %p106
      %p108 = scmp.ne.s32.totalorder %s97, %s100
      %p109 = scmp.eq.s32.totalorder %s24, 1
      %p110 = por %p108, %p109
      %p111 = scmp.ne.s32.totalorder %s100, %s101
      %p112 = scmp.eq.s32.totalorder %s24, 0
      %p113 = por %p111, %p112
      %p114 = scmp.ne.s32.totalorder %s100, %s101
      %p115 = scmp.eq.s32.totalorder %s25, 1
      %p116 = por %p114, %p115
      %p118 = scmp.ne.s32.totalorder %s101, %s117
      %p119 = scmp.eq.s32.totalorder %s25, 0
      %p120 = por %p118, %p119
      %s122 = sadd.s32 %s121, 1
      %p125 = scmp.eq.s32.totalorder %s19, 1
      %p126 = scmp.ne.s32.totalorder %s121, %s123
      %p127 = scmp.eq.s32.totalorder %s19, 0
      %p128 = por %p126, %p127
      %p129 = scmp.ne.s32.totalorder %s121, %s123
      %p130 = scmp.eq.s32.totalorder %s24, 1
      %p131 = por %p129, %p130
      %p132 = scmp.ne.s32.totalorder %s123, %s124
      %p133 = scmp.eq.s32.totalorder %s24, 0
      %p134 = por %p132, %p133
      %p135 = scmp.ne.s32.totalorder %s123, %s124
      %p136 = scmp.eq.s32.totalorder %s25, 1
      %p137 = por %p135, %p136
      %p139 = scmp.ne.s32.totalorder %s124, %s138
      %p140 = scmp.eq.s32.totalorder %s25, 0
      %p141 = por %p139, %p140
      %s142 = ssub.s32 %s26, %s38
      %p143 = scmp.eq.s32.totalorder %s142, 0
      %s145 = sadd.s32 %s144, 1
      %s146 = scalar_select %p143, %s144, %s145
      %p149 = pneg %p143
      %p150 = scmp.eq.s32.totalorder %s19, 1
      %p151 = por %p149, %p150
      %p152 = scmp.ne.s32.totalorder %s144, %s147
      %p153 = scmp.eq.s32.totalorder %s19, 0
      %p154 = por %p152, %p153
      %p155 = scmp.ne.s32.totalorder %s144, %s147
      %p156 = scmp.eq.s32.totalorder %s24, 1
      %p157 = por %p155, %p156
      %p158 = scmp.ne.s32.totalorder %s147, %s148
      %p159 = scmp.eq.s32.totalorder %s24, 0
      %p160 = por %p158, %p159
      %p161 = scmp.ne.s32.totalorder %s147, %s148
      %p162 = scmp.eq.s32.totalorder %s25, 1
      %p163 = por %p161, %p162
      %p165 = scmp.ne.s32.totalorder %s148, %s164
      %p166 = scmp.eq.s32.totalorder %s25, 0
      %p167 = por %p165, %p166
      %p168 = scmp.le.s32.totalorder 1, %s19
      %p169 = scmp.lt.s32.totalorder %s19, 3
      %p170 = pnand %p168, %p169
      %p171 = pneg %p170
      // Predicated region
      $region9: #{tpu_custom_call.1} parent=5 // pred_check
        _
      $region10: #{tpu_custom_call.1} parent=5 // pred_check_branch
        %173 = sbr.rel (%p170) target = $region12
      $region11: #{tpu_custom_call.1} parent=5 // pred_region
        %s174 = ssub.s32 %s19, 1
        // Predicated region
        $region13: #{tpu_custom_call.1} parent=11 // pred_check
          %p175 = pneg %p113
        $region14: #{tpu_custom_call.1} parent=11 // pred_check_branch
          %177 = sbr.rel (%p175) target = $region16
        $region15: #{tpu_custom_call.1} parent=11 // pred_region
          %s178 = smul.u32 32, %s29
          %s180 = ssub.s32 4096, 4096
          %181 = vsyncadd [#allocation7], %s180
          %s182 = smul.addr %s178, 2
          %s183 = smul.addr %s182, 64
          %s184 = scalar_lea.hbm %s2, %s183
          %s185 = sshll.u32 [#allocation8], 4
          %s186 = int_to_ptr.vmem [resolvable:$true] %s185
          %191 = dma.hbm_to_vmem [thread:$0]  %s184, 4096, %s186, [#allocation7], 128, 128, 8
        $region16: #{tpu_custom_call.1} parent=11 // pred_fallthru
          _
        // Predicated region
        $region17: #{tpu_custom_call.1} parent=11 // pred_check
          %p192 = pneg %p134
        $region18: #{tpu_custom_call.1} parent=11 // pred_check_branch
          %194 = sbr.rel (%p192) target = $region20
        $region19: #{tpu_custom_call.1} parent=11 // pred_region
          _
        $region20: #{tpu_custom_call.1} parent=11 // pred_fallthru
          _
      $region12: #{tpu_custom_call.1} parent=5 // pred_fallthru
        _
      %p195 = scmp.lt.s32.totalorder %s19, 2
      // Predicated region
      $region21: #{tpu_custom_call.1} parent=5 // pred_check
        %p196 = pneg %p195
      $region22: #{tpu_custom_call.1} parent=5 // pred_check_branch
        %198 = sbr.rel (%p196) target = $region24
      $region23: #{tpu_custom_call.1} parent=5 // pred_region
        // Predicated region
        $region25: #{tpu_custom_call.1} parent=23 // pred_check
          %p199 = pneg %p53
        $region26: #{tpu_custom_call.1} parent=23 // pred_check_branch
          %201 = sbr.rel (%p199) target = $region28
        $region27: #{tpu_custom_call.1} parent=23 // pred_region
          %s202 = sand.u32 %s43, 1
          %s203 = scalar_lea.sflag [#allocation4], %s202
          %s204 = sand.u32 %s43, 1
          %s205 = smul.addr %s204, 64
          %s206 = scalar_lea.vmem [#allocation3], %s205
          %s207 = smul.u32 4, %s26
          %s208 = smul.u32 2, %s27
          %s210 = ssub.s32 1024, 1024
          %211 = vsyncadd %s203, %s210
          %s212 = smul.addr %s207, 2
          %s213 = sadd.s32 %s208, %s212
          %s214 = smul.addr %s213, 128
          %s215 = scalar_lea.hbm %s0, %s214
          %s216 = sshll.u32 %s206, 4
          %s217 = int_to_ptr.vmem [resolvable:$true] %s216
          %222 = dma.hbm_to_vmem [thread:$0]  %s215, 1024, %s217, %s203, 256, 256, 16
        $region28: #{tpu_custom_call.1} parent=23 // pred_fallthru
          _
        // Predicated region
        $region29: #{tpu_custom_call.1} parent=23 // pred_check
          %p223 = pneg %p81
        $region30: #{tpu_custom_call.1} parent=23 // pred_check_branch
          %225 = sbr.rel (%p223) target = $region32
        $region31: #{tpu_custom_call.1} parent=23 // pred_region
          %s226 = sand.u32 %s19, 1
          %s227 = scalar_lea.sflag [#allocation7], %s226
          %s228 = sand.u32 %s71, 1
          %s229 = smul.addr %s228, 64
          %s230 = scalar_lea.vmem [#allocation6], %s229
          %s231 = smul.u32 4, %s26
          %s232 = smul.u32 2, %s27
          %s234 = ssub.s32 1024, 1024
          %235 = vsyncadd %s227, %s234
          %s236 = smul.addr %s231, 2
          %s237 = sadd.s32 %s232, %s236
          %s238 = smul.addr %s237, 128
          %s239 = scalar_lea.hbm %s1, %s238
          %s240 = sshll.u32 %s230, 4
          %s241 = int_to_ptr.vmem [resolvable:$true] %s240
          %246 = dma.hbm_to_vmem [thread:$0]  %s239, 1024, %s241, %s227, 256, 256, 16
        $region32: #{tpu_custom_call.1} parent=23 // pred_fallthru
          _
      $region24: #{tpu_custom_call.1} parent=5 // pred_fallthru
        _
      %p247 = scmp.le.s32.totalorder 1, %s19
      %p248 = scmp.lt.s32.totalorder %s19, 3
      %p249 = pnand %p247, %p248
      %p250 = pneg %p249
      // Predicated region
      $region33: #{tpu_custom_call.1} parent=5 // pred_check
        _
      $region34: #{tpu_custom_call.1} parent=5 // pred_check_branch
        %252 = sbr.rel (%p249) target = $region36
      $region35: #{tpu_custom_call.1} parent=5 // pred_region
        %s253 = ssub.s32 %s19, 1
        %s254 = sand.u32 %s46, 1
        %s255 = scalar_lea.sflag [#allocation4], %s254
        %s256 = sand.u32 %s46, 1
        %s257 = smul.addr %s256, 64
        %s258 = scalar_lea.vmem [#allocation3], %s257
        // Predicated region
        $region37: #{tpu_custom_call.1} parent=35 // pred_check
          %p259 = pneg %p59
        $region38: #{tpu_custom_call.1} parent=35 // pred_check_branch
          %261 = sbr.rel (%p259) target = $region40
        $region39: #{tpu_custom_call.1} parent=35 // pred_region
          %262 = dma.done %s255, 1024
        $region40: #{tpu_custom_call.1} parent=35 // pred_fallthru
          _
        %s263 = sand.u32 %s24, 1
        %s264 = scalar_lea.sflag [#allocation7], %s263
        %s265 = sand.u32 %s74, 1
        %s266 = smul.addr %s265, 64
        %s267 = scalar_lea.vmem [#allocation6], %s266
        // Predicated region
        $region41: #{tpu_custom_call.1} parent=35 // pred_check
          %p268 = pneg %p87
        $region42: #{tpu_custom_call.1} parent=35 // pred_check_branch
          %270 = sbr.rel (%p268) target = $region44
        $region43: #{tpu_custom_call.1} parent=35 // pred_region
          %271 = dma.done %s264, 1024
        $region44: #{tpu_custom_call.1} parent=35 // pred_fallthru
          _
        // Predicated region
        $region45: #{tpu_custom_call.1} parent=35 // pred_check
          %p272 = pneg %p113
        $region46: #{tpu_custom_call.1} parent=35 // pred_check_branch
          %274 = sbr.rel (%p272) target = $region48
        $region47: #{tpu_custom_call.1} parent=35 // pred_region
          %275 = dma.done [#allocation7], 4096
        $region48: #{tpu_custom_call.1} parent=35 // pred_fallthru
          _
        %s276 = sand.u32 %s46, 1
        %s277 = scalar_lea.sflag [#allocation4], %s276
        %s278 = sand.u32 %s46, 1
        %s279 = smul.addr %s278, 64
        %s280 = scalar_lea.vmem [#allocation3], %s279
        %p281 = pneg %p59
        %p282 = pneg %p56
        %s283 = sand.u32 %s24, 1
        %s284 = scalar_lea.sflag [#allocation7], %s283
        %s285 = sand.u32 %s74, 1
        %s286 = smul.addr %s285, 64
        %s287 = scalar_lea.vmem [#allocation6], %s286
        %p288 = pneg %p87
        %p289 = pneg %p84
        %p290 = pneg %p113
        %p291 = pneg %p110
        %p292 = pneg %p134
        %p293 = pneg %p131
        %p294 = pneg %p160
        %p295 = pneg %p157
        %s296 = sand.u32 %s147, 1
        %s297 = scalar_lea.sflag [#allocation5], %s296
        %s298 = sand.u32 %s147, 1
        %s299 = smul.addr %s298, 64
        %s300 = scalar_lea.vmem [#allocation9], %s299
        %s301 = smul.u32 4, %s28
        %s302 = smul.u32 2, %s29
        %s303 = smul.u32 4, %s28
        %s304 = smul.u32 2, %s29
        %s305 = smul.u32 32, %s29
        %s306 = smul.u32 4, %s28
        %p307 = scmp.eq.s32.totalorder %s29, 0
        // Predicated region
        $region49: #{tpu_custom_call.1} parent=35 // pred_check
          %p308 = pneg %p307
        $region50: #{tpu_custom_call.1} parent=35 // pred_check_branch
          %310 = sbr.rel (%p308) target = $region52
        $region51: #{tpu_custom_call.1} parent=35 // pred_region
          %311 = vst [vmem:[#allocation2] sm:$0xff] 0.0
          %312 = vst [vmem:[#allocation2 + $0x8] sm:$0xff] 0.0
          %313 = vst [vmem:[#allocation2 + $0x10] sm:$0xff] 0.0
          %314 = vst [vmem:[#allocation2 + $0x18] sm:$0xff] 0.0
          %315 = vst [vmem:[#allocation2 + $0x20] sm:$0xff] 0.0
          %316 = vst [vmem:[#allocation2 + $0x28] sm:$0xff] 0.0
          %317 = vst [vmem:[#allocation2 + $0x30] sm:$0xff] 0.0
          %318 = vst [vmem:[#allocation2 + $0x38] sm:$0xff] 0.0
          %319 = vst [vmem:[#allocation2 + $0x40] sm:$0xff] 0.0
          %320 = vst [vmem:[#allocation2 + $0x48] sm:$0xff] 0.0
          %321 = vst [vmem:[#allocation2 + $0x50] sm:$0xff] 0.0
          %322 = vst [vmem:[#allocation2 + $0x58] sm:$0xff] 0.0
          %323 = vst [vmem:[#allocation2 + $0x60] sm:$0xff] 0.0
          %324 = vst [vmem:[#allocation2 + $0x68] sm:$0xff] 0.0
          %325 = vst [vmem:[#allocation2 + $0x70] sm:$0xff] 0.0
          %326 = vst [vmem:[#allocation2 + $0x78] sm:$0xff] 0.0
        $region52: #{tpu_custom_call.1} parent=35 // pred_fallthru
          _
        %v327 = vld [vmem:[#allocation2] sm:$0xff]
        %v328 = vld [vmem:[#allocation2 + $0x8] sm:$0xff]
        %v329 = vld [vmem:[#allocation2 + $0x10] sm:$0xff]
        %v330 = vld [vmem:[#allocation2 + $0x18] sm:$0xff]
        %v331 = vld [vmem:[#allocation2 + $0x20] sm:$0xff]
        %v332 = vld [vmem:[#allocation2 + $0x28] sm:$0xff]
        %v333 = vld [vmem:[#allocation2 + $0x30] sm:$0xff]
        %v334 = vld [vmem:[#allocation2 + $0x38] sm:$0xff]
        %v335 = vld [vmem:[%s258] sm:$0xff]
        %v336 = vld [vmem:[%s258 + $0x8] sm:$0xff]
        %v337 = vld [vmem:[%s258 + $0x10] sm:$0xff]
        %v338 = vld [vmem:[%s258 + $0x18] sm:$0xff]
        %v339 = vld [vmem:[%s258 + $0x20] sm:$0xff]
        %v340 = vld [vmem:[%s258 + $0x28] sm:$0xff]
        %v341 = vld [vmem:[%s258 + $0x30] sm:$0xff]
        %v342 = vld [vmem:[%s258 + $0x38] sm:$0xff]
        %v343 = vpack.c.bf16 %v337, %v335
        %v344 = vpack.c.bf16 %v338, %v336
        %v345 = vpack.c.bf16 %v341, %v339
        %v346 = vpack.c.bf16 %v342, %v340
        %v347 = vld [vmem:[#allocation8] sm:$0xff]
        %v348 = vld [vmem:[#allocation8 + $0x8] sm:$0xff]
        %v349 = vld [vmem:[#allocation8 + $0x10] sm:$0xff]
        %v350 = vld [vmem:[#allocation8 + $0x18] sm:$0xff]
        %v351 = vld [vmem:[#allocation8 + $0x20] sm:$0xff]
        %v352 = vld [vmem:[#allocation8 + $0x28] sm:$0xff]
        %v353 = vld [vmem:[#allocation8 + $0x30] sm:$0xff]
        %v354 = vld [vmem:[#allocation8 + $0x38] sm:$0xff]
        %v355 = vld [vmem:[#allocation8 + $0x40] sm:$0xff]
        %v356 = vld [vmem:[#allocation8 + $0x48] sm:$0xff]
        %v357 = vld [vmem:[#allocation8 + $0x50] sm:$0xff]
        %v358 = vld [vmem:[#allocation8 + $0x58] sm:$0xff]
        %v359 = vld [vmem:[#allocation8 + $0x60] sm:$0xff]
        %v360 = vld [vmem:[#allocation8 + $0x68] sm:$0xff]
        %v361 = vld [vmem:[#allocation8 + $0x70] sm:$0xff]
        %v362 = vld [vmem:[#allocation8 + $0x78] sm:$0xff]
        %v363 = vld [vmem:[#allocation8 + $0x80] sm:$0xff]
        %v364 = vld [vmem:[#allocation8 + $0x88] sm:$0xff]
        %v365 = vld [vmem:[#allocation8 + $0x90] sm:$0xff]
        %v366 = vld [vmem:[#allocation8 + $0x98] sm:$0xff]
        %v367 = vld [vmem:[#allocation8 + $0xa0] sm:$0xff]
        %v368 = vld [vmem:[#allocation8 + $0xa8] sm:$0xff]
        %v369 = vld [vmem:[#allocation8 + $0xb0] sm:$0xff]
        %v370 = vld [vmem:[#allocation8 + $0xb8] sm:$0xff]
        %v371 = vld [vmem:[#allocation8 + $0xc0] sm:$0xff]
        %v372 = vld [vmem:[#allocation8 + $0xc8] sm:$0xff]
        %v373 = vld [vmem:[#allocation8 + $0xd0] sm:$0xff]
        %v374 = vld [vmem:[#allocation8 + $0xd8] sm:$0xff]
        %v375 = vld [vmem:[#allocation8 + $0xe0] sm:$0xff]
        %v376 = vld [vmem:[#allocation8 + $0xe8] sm:$0xff]
        %v377 = vld [vmem:[#allocation8 + $0xf0] sm:$0xff]
        %v378 = vld [vmem:[#allocation8 + $0xf8] sm:$0xff]
        %v411 = vunpack.c.l.b16 %v347
        %v412 = vunpack.c.h.b16 %v347
        %v413 = vunpack.c.l.b16 %v348
        %v414 = vunpack.c.h.b16 %v348
        %v415 = vunpack.c.l.b16 %v349
        %v416 = vunpack.c.h.b16 %v349
        %v417 = vunpack.c.l.b16 %v350
        %v418 = vunpack.c.h.b16 %v350
        %v419 = vunpack.c.l.b16 %v351
        %v420 = vunpack.c.h.b16 %v351
        %v421 = vunpack.c.l.b16 %v352
        %v422 = vunpack.c.h.b16 %v352
        %v423 = vunpack.c.l.b16 %v353
        %v424 = vunpack.c.h.b16 %v353
        %v425 = vunpack.c.l.b16 %v354
        %v426 = vunpack.c.h.b16 %v354
        %v427 = vunpack.c.l.b16 %v355
        %v428 = vunpack.c.h.b16 %v355
        %v429 = vunpack.c.l.b16 %v356
        %v430 = vunpack.c.h.b16 %v356
        %v431 = vunpack.c.l.b16 %v357
        %v432 = vunpack.c.h.b16 %v357
        %v433 = vunpack.c.l.b16 %v358
        %v434 = vunpack.c.h.b16 %v358
        %v435 = vunpack.c.l.b16 %v359
        %v436 = vunpack.c.h.b16 %v359
        %v437 = vunpack.c.l.b16 %v360
        %v438 = vunpack.c.h.b16 %v360
        %v439 = vunpack.c.l.b16 %v361
        %v440 = vunpack.c.h.b16 %v361
        %v441 = vunpack.c.l.b16 %v362
        %v442 = vunpack.c.h.b16 %v362
        %v443 = vunpack.c.l.b16 %v363
        %v444 = vunpack.c.h.b16 %v363
        %v445 = vunpack.c.l.b16 %v364
        %v446 = vunpack.c.h.b16 %v364
        %v447 = vunpack.c.l.b16 %v365
        %v448 = vunpack.c.h.b16 %v365
        %v449 = vunpack.c.l.b16 %v366
        %v450 = vunpack.c.h.b16 %v366
        %v451 = vunpack.c.l.b16 %v367
        %v452 = vunpack.c.h.b16 %v367
        %v453 = vunpack.c.l.b16 %v368
        %v454 = vunpack.c.h.b16 %v368
        %v455 = vunpack.c.l.b16 %v369
        %v456 = vunpack.c.h.b16 %v369
        %v457 = vunpack.c.l.b16 %v370
        %v458 = vunpack.c.h.b16 %v370
        %v459 = vunpack.c.l.b16 %v371
        %v460 = vunpack.c.h.b16 %v371
        %v461 = vunpack.c.l.b16 %v372
        %v462 = vunpack.c.h.b16 %v372
        %v463 = vunpack.c.l.b16 %v373
        %v464 = vunpack.c.h.b16 %v373
        %v465 = vunpack.c.l.b16 %v374
        %v466 = vunpack.c.h.b16 %v374
        %v467 = vunpack.c.l.b16 %v375
        %v468 = vunpack.c.h.b16 %v375
        %v469 = vunpack.c.l.b16 %v376
        %v470 = vunpack.c.h.b16 %v376
        %v471 = vunpack.c.l.b16 %v377
        %v472 = vunpack.c.h.b16 %v377
        %v473 = vunpack.c.l.b16 %v378
        %v474 = vunpack.c.h.b16 %v378
        %v475 = vpack.c.b16 %v413, %v411
        %v476 = vpack.c.b16 %v414, %v412
        %v477 = vpack.c.b16 %v417, %v415
        %v478 = vpack.c.b16 %v418, %v416
        %v479 = vpack.c.b16 %v421, %v419
        %v480 = vpack.c.b16 %v422, %v420
        %v481 = vpack.c.b16 %v425, %v423
        %v482 = vpack.c.b16 %v426, %v424
        %v483 = vpack.c.b16 %v429, %v427
        %v484 = vpack.c.b16 %v430, %v428
        %v485 = vpack.c.b16 %v433, %v431
        %v486 = vpack.c.b16 %v434, %v432
        %v487 = vpack.c.b16 %v437, %v435
        %v488 = vpack.c.b16 %v438, %v436
        %v489 = vpack.c.b16 %v441, %v439
        %v490 = vpack.c.b16 %v442, %v440
        %v491 = vpack.c.b16 %v445, %v443
        %v492 = vpack.c.b16 %v446, %v444
        %v493 = vpack.c.b16 %v449, %v447
        %v494 = vpack.c.b16 %v450, %v448
        %v495 = vpack.c.b16 %v453, %v451
        %v496 = vpack.c.b16 %v454, %v452
        %v497 = vpack.c.b16 %v457, %v455
        %v498 = vpack.c.b16 %v458, %v456
        %v499 = vpack.c.b16 %v461, %v459
        %v500 = vpack.c.b16 %v462, %v460
        %v501 = vpack.c.b16 %v465, %v463
        %v502 = vpack.c.b16 %v466, %v464
        %v503 = vpack.c.b16 %v469, %v467
        %v504 = vpack.c.b16 %v470, %v468
        %v505 = vpack.c.b16 %v473, %v471
        %v506 = vpack.c.b16 %v474, %v472
        %539 = vmatprep.subr.bf16.mxu0 %v476
        %540 = vmatpush1.bf16.msra.mxu0 %v475
        %541 = vmatprep.subr.bf16.mxu0 %v478
        %542 = vmatpush1.bf16.msra.mxu0 %v477
        %543 = vmatprep.subr.bf16.mxu0 %v480
        %544 = vmatpush1.bf16.msra.mxu0 %v479
        %545 = vmatprep.subr.bf16.mxu0 %v482
        %546 = vmatpush1.bf16.msra.mxu0 %v481
        %547 = vmatprep.subr.bf16.mxu0 %v484
        %548 = vmatpush1.bf16.msra.mxu0 %v483
        %549 = vmatprep.subr.bf16.mxu0 %v486
        %550 = vmatpush1.bf16.msra.mxu0 %v485
        %551 = vmatprep.subr.bf16.mxu0 %v488
        %552 = vmatpush1.bf16.msra.mxu0 %v487
        %553 = vmatprep.subr.bf16.mxu0 %v490
        %554 = vmatpush1.bf16.msra.mxu0 %v489
        %555 = vmatprep.subr.bf16.mxu0 %v492
        %556 = vmatpush1.bf16.msra.mxu0 %v491
        %557 = vmatprep.subr.bf16.mxu0 %v494
        %558 = vmatpush1.bf16.msra.mxu0 %v493
        %559 = vmatprep.subr.bf16.mxu0 %v496
        %560 = vmatpush1.bf16.msra.mxu0 %v495
        %561 = vmatprep.subr.bf16.mxu0 %v498
        %562 = vmatpush1.bf16.msra.mxu0 %v497
        %563 = vmatprep.subr.bf16.mxu0 %v500
        %564 = vmatpush1.bf16.msra.mxu0 %v499
        %565 = vmatprep.subr.bf16.mxu0 %v502
        %566 = vmatpush1.bf16.msra.mxu0 %v501
        %567 = vmatprep.subr.bf16.mxu0 %v504
        %568 = vmatpush1.bf16.msra.mxu0 %v503
        %569 = vmatprep.subr.bf16.mxu0 %v506
        %570 = vmatpush1.bf16.msra.mxu0 %v505
        %571 = vmatprep.mubr.bf16.mxu0 %v344
        %572 = vmatmul.mubr.bf16.gmra.mrb[0].mxu0 %v343
        %v573 = vpop.f32.mrb[0].mxu0
        %v574 = vadd.f32 0.0, %v573
        %v575 = vpop.f32.mrb[0].mxu0
        %v576 = vadd.f32 0.0, %v575
        %v577 = vpop.f32.mrb[0].mxu0
        %v578 = vadd.f32 0.0, %v577
        %v579 = vpop.f32.mrb[0].mxu0
        %v580 = vadd.f32 0.0, %v579
        %581 = vmatprep.mubr.bf16.mxu0 %v346
        %582 = vmatmul.mubr.bf16.gmra.mrb[0].mxu0 %v345
        %v583 = vpop.f32.mrb[0].mxu0
        %v584 = vadd.f32 0.0, %v583
        %v585 = vpop.f32.mrb[0].mxu0
        %v586 = vadd.f32 0.0, %v585
        %v587 = vpop.f32.mrb[0].mxu0
        %v588 = vadd.f32 0.0, %v587
        %v589 = vpop.f32.mrb[0].mxu0
        %v590 = vadd.f32 0.0, %v589
        %591 = vdwg.mxu0
        %v592 = vadd.f32 %v327, %v574
        %v593 = vadd.f32 %v328, %v576
        %v594 = vadd.f32 %v329, %v578
        %v595 = vadd.f32 %v330, %v580
        %v596 = vadd.f32 %v331, %v584
        %v597 = vadd.f32 %v332, %v586
        %v598 = vadd.f32 %v333, %v588
        %v599 = vadd.f32 %v334, %v590
        %600 = vst [vmem:[#allocation2] sm:$0xff] %v592
        %601 = vst [vmem:[#allocation2 + $0x8] sm:$0xff] %v593
        %602 = vst [vmem:[#allocation2 + $0x10] sm:$0xff] %v594
        %603 = vst [vmem:[#allocation2 + $0x18] sm:$0xff] %v595
        %604 = vst [vmem:[#allocation2 + $0x20] sm:$0xff] %v596
        %605 = vst [vmem:[#allocation2 + $0x28] sm:$0xff] %v597
        %606 = vst [vmem:[#allocation2 + $0x30] sm:$0xff] %v598
        %607 = vst [vmem:[#allocation2 + $0x38] sm:$0xff] %v599
        %s608 = scalar_lea.vmem [#allocation2], 64
        %v609 = vld [vmem:[%s608] sm:$0xff]
        %v610 = vld [vmem:[%s608 + $0x8] sm:$0xff]
        %v611 = vld [vmem:[%s608 + $0x10] sm:$0xff]
        %v612 = vld [vmem:[%s608 + $0x18] sm:$0xff]
        %v613 = vld [vmem:[%s608 + $0x20] sm:$0xff]
        %v614 = vld [vmem:[%s608 + $0x28] sm:$0xff]
        %v615 = vld [vmem:[%s608 + $0x30] sm:$0xff]
        %v616 = vld [vmem:[%s608 + $0x38] sm:$0xff]
        %v617 = vld [vmem:[%s267] sm:$0xff]
        %v618 = vld [vmem:[%s267 + $0x8] sm:$0xff]
        %v619 = vld [vmem:[%s267 + $0x10] sm:$0xff]
        %v620 = vld [vmem:[%s267 + $0x18] sm:$0xff]
        %v621 = vld [vmem:[%s267 + $0x20] sm:$0xff]
        %v622 = vld [vmem:[%s267 + $0x28] sm:$0xff]
        %v623 = vld [vmem:[%s267 + $0x30] sm:$0xff]
        %v624 = vld [vmem:[%s267 + $0x38] sm:$0xff]
        %v625 = vpack.c.bf16 %v619, %v617
        %v626 = vpack.c.bf16 %v620, %v618
        %v627 = vpack.c.bf16 %v623, %v621
        %v628 = vpack.c.bf16 %v624, %v622
        %v629 = vld [vmem:[#allocation8] sm:$0xff]
        %v630 = vld [vmem:[#allocation8 + $0x8] sm:$0xff]
        %v631 = vld [vmem:[#allocation8 + $0x10] sm:$0xff]
        %v632 = vld [vmem:[#allocation8 + $0x18] sm:$0xff]
        %v633 = vld [vmem:[#allocation8 + $0x20] sm:$0xff]
        %v634 = vld [vmem:[#allocation8 + $0x28] sm:$0xff]
        %v635 = vld [vmem:[#allocation8 + $0x30] sm:$0xff]
        %v636 = vld [vmem:[#allocation8 + $0x38] sm:$0xff]
        %v637 = vld [vmem:[#allocation8 + $0x40] sm:$0xff]
        %v638 = vld [vmem:[#allocation8 + $0x48] sm:$0xff]
        %v639 = vld [vmem:[#allocation8 + $0x50] sm:$0xff]
        %v640 = vld [vmem:[#allocation8 + $0x58] sm:$0xff]
        %v641 = vld [vmem:[#allocation8 + $0x60] sm:$0xff]
        %v642 = vld [vmem:[#allocation8 + $0x68] sm:$0xff]
        %v643 = vld [vmem:[#allocation8 + $0x70] sm:$0xff]
        %v644 = vld [vmem:[#allocation8 + $0x78] sm:$0xff]
        %v645 = vld [vmem:[#allocation8 + $0x80] sm:$0xff]
        %v646 = vld [vmem:[#allocation8 + $0x88] sm:$0xff]
        %v647 = vld [vmem:[#allocation8 + $0x90] sm:$0xff]
        %v648 = vld [vmem:[#allocation8 + $0x98] sm:$0xff]
        %v649 = vld [vmem:[#allocation8 + $0xa0] sm:$0xff]
        %v650 = vld [vmem:[#allocation8 + $0xa8] sm:$0xff]
        %v651 = vld [vmem:[#allocation8 + $0xb0] sm:$0xff]
        %v652 = vld [vmem:[#allocation8 + $0xb8] sm:$0xff]
        %v653 = vld [vmem:[#allocation8 + $0xc0] sm:$0xff]
        %v654 = vld [vmem:[#allocation8 + $0xc8] sm:$0xff]
        %v655 = vld [vmem:[#allocation8 + $0xd0] sm:$0xff]
        %v656 = vld [vmem:[#allocation8 + $0xd8] sm:$0xff]
        %v657 = vld [vmem:[#allocation8 + $0xe0] sm:$0xff]
        %v658 = vld [vmem:[#allocation8 + $0xe8] sm:$0xff]
        %v659 = vld [vmem:[#allocation8 + $0xf0] sm:$0xff]
        %v660 = vld [vmem:[#allocation8 + $0xf8] sm:$0xff]
        %v693 = vunpack.c.l.b16 %v629
        %v694 = vunpack.c.h.b16 %v629
        %v695 = vunpack.c.l.b16 %v630
        %v696 = vunpack.c.h.b16 %v630
        %v697 = vunpack.c.l.b16 %v631
        %v698 = vunpack.c.h.b16 %v631
        %v699 = vunpack.c.l.b16 %v632
        %v700 = vunpack.c.h.b16 %v632
        %v701 = vunpack.c.l.b16 %v633
        %v702 = vunpack.c.h.b16 %v633
        %v703 = vunpack.c.l.b16 %v634
        %v704 = vunpack.c.h.b16 %v634
        %v705 = vunpack.c.l.b16 %v635
        %v706 = vunpack.c.h.b16 %v635
        %v707 = vunpack.c.l.b16 %v636
        %v708 = vunpack.c.h.b16 %v636
        %v709 = vunpack.c.l.b16 %v637
        %v710 = vunpack.c.h.b16 %v637
        %v711 = vunpack.c.l.b16 %v638
        %v712 = vunpack.c.h.b16 %v638
        %v713 = vunpack.c.l.b16 %v639
        %v714 = vunpack.c.h.b16 %v639
        %v715 = vunpack.c.l.b16 %v640
        %v716 = vunpack.c.h.b16 %v640
        %v717 = vunpack.c.l.b16 %v641
        %v718 = vunpack.c.h.b16 %v641
        %v719 = vunpack.c.l.b16 %v642
        %v720 = vunpack.c.h.b16 %v642
        %v721 = vunpack.c.l.b16 %v643
        %v722 = vunpack.c.h.b16 %v643
        %v723 = vunpack.c.l.b16 %v644
        %v724 = vunpack.c.h.b16 %v644
        %v725 = vunpack.c.l.b16 %v645
        %v726 = vunpack.c.h.b16 %v645
        %v727 = vunpack.c.l.b16 %v646
        %v728 = vunpack.c.h.b16 %v646
        %v729 = vunpack.c.l.b16 %v647
        %v730 = vunpack.c.h.b16 %v647
        %v731 = vunpack.c.l.b16 %v648
        %v732 = vunpack.c.h.b16 %v648
        %v733 = vunpack.c.l.b16 %v649
        %v734 = vunpack.c.h.b16 %v649
        %v735 = vunpack.c.l.b16 %v650
        %v736 = vunpack.c.h.b16 %v650
        %v737 = vunpack.c.l.b16 %v651
        %v738 = vunpack.c.h.b16 %v651
        %v739 = vunpack.c.l.b16 %v652
        %v740 = vunpack.c.h.b16 %v652
        %v741 = vunpack.c.l.b16 %v653
        %v742 = vunpack.c.h.b16 %v653
        %v743 = vunpack.c.l.b16 %v654
        %v744 = vunpack.c.h.b16 %v654
        %v745 = vunpack.c.l.b16 %v655
        %v746 = vunpack.c.h.b16 %v655
        %v747 = vunpack.c.l.b16 %v656
        %v748 = vunpack.c.h.b16 %v656
        %v749 = vunpack.c.l.b16 %v657
        %v750 = vunpack.c.h.b16 %v657
        %v751 = vunpack.c.l.b16 %v658
        %v752 = vunpack.c.h.b16 %v658
        %v753 = vunpack.c.l.b16 %v659
        %v754 = vunpack.c.h.b16 %v659
        %v755 = vunpack.c.l.b16 %v660
        %v756 = vunpack.c.h.b16 %v660
        %v757 = vpack.c.b16 %v695, %v693
        %v758 = vpack.c.b16 %v696, %v694
        %v759 = vpack.c.b16 %v699, %v697
        %v760 = vpack.c.b16 %v700, %v698
        %v761 = vpack.c.b16 %v703, %v701
        %v762 = vpack.c.b16 %v704, %v702
        %v763 = vpack.c.b16 %v707, %v705
        %v764 = vpack.c.b16 %v708, %v706
        %v765 = vpack.c.b16 %v711, %v709
        %v766 = vpack.c.b16 %v712, %v710
        %v767 = vpack.c.b16 %v715, %v713
        %v768 = vpack.c.b16 %v716, %v714
        %v769 = vpack.c.b16 %v719, %v717
        %v770 = vpack.c.b16 %v720, %v718
        %v771 = vpack.c.b16 %v723, %v721
        %v772 = vpack.c.b16 %v724, %v722
        %v773 = vpack.c.b16 %v727, %v725
        %v774 = vpack.c.b16 %v728, %v726
        %v775 = vpack.c.b16 %v731, %v729
        %v776 = vpack.c.b16 %v732, %v730
        %v777 = vpack.c.b16 %v735, %v733
        %v778 = vpack.c.b16 %v736, %v734
        %v779 = vpack.c.b16 %v739, %v737
        %v780 = vpack.c.b16 %v740, %v738
        %v781 = vpack.c.b16 %v743, %v741
        %v782 = vpack.c.b16 %v744, %v742
        %v783 = vpack.c.b16 %v747, %v745
        %v784 = vpack.c.b16 %v748, %v746
        %v785 = vpack.c.b16 %v751, %v749
        %v786 = vpack.c.b16 %v752, %v750
        %v787 = vpack.c.b16 %v755, %v753
        %v788 = vpack.c.b16 %v756, %v754
        %821 = vmatprep.subr.bf16.mxu0 %v758
        %822 = vmatpush1.bf16.msra.mxu0 %v757
        %823 = vmatprep.subr.bf16.mxu0 %v760
        %824 = vmatpush1.bf16.msra.mxu0 %v759
        %825 = vmatprep.subr.bf16.mxu0 %v762
        %826 = vmatpush1.bf16.msra.mxu0 %v761
        %827 = vmatprep.subr.bf16.mxu0 %v764
        %828 = vmatpush1.bf16.msra.mxu0 %v763
        %829 = vmatprep.subr.bf16.mxu0 %v766
        %830 = vmatpush1.bf16.msra.mxu0 %v765
        %831 = vmatprep.subr.bf16.mxu0 %v768
        %832 = vmatpush1.bf16.msra.mxu0 %v767
        %833 = vmatprep.subr.bf16.mxu0 %v770
        %834 = vmatpush1.bf16.msra.mxu0 %v769
        %835 = vmatprep.subr.bf16.mxu0 %v772
        %836 = vmatpush1.bf16.msra.mxu0 %v771
        %837 = vmatprep.subr.bf16.mxu0 %v774
        %838 = vmatpush1.bf16.msra.mxu0 %v773
        %839 = vmatprep.subr.bf16.mxu0 %v776
        %840 = vmatpush1.bf16.msra.mxu0 %v775
        %841 = vmatprep.subr.bf16.mxu0 %v778
        %842 = vmatpush1.bf16.msra.mxu0 %v777
        %843 = vmatprep.subr.bf16.mxu0 %v780
        %844 = vmatpush1.bf16.msra.mxu0 %v779
        %845 = vmatprep.subr.bf16.mxu0 %v782
        %846 = vmatpush1.bf16.msra.mxu0 %v781
        %847 = vmatprep.subr.bf16.mxu0 %v784
        %848 = vmatpush1.bf16.msra.mxu0 %v783
        %849 = vmatprep.subr.bf16.mxu0 %v786
        %850 = vmatpush1.bf16.msra.mxu0 %v785
        %851 = vmatprep.subr.bf16.mxu0 %v788
        %852 = vmatpush1.bf16.msra.mxu0 %v787
        %853 = vmatprep.mubr.bf16.mxu0 %v626
        %854 = vmatmul.mubr.bf16.gmra.mrb[0].mxu0 %v625
        %v855 = vpop.f32.mrb[0].mxu0
        %v856 = vadd.f32 0.0, %v855
        %v857 = vpop.f32.mrb[0].mxu0
        %v858 = vadd.f32 0.0, %v857
        %v859 = vpop.f32.mrb[0].mxu0
        %v860 = vadd.f32 0.0, %v859
        %v861 = vpop.f32.mrb[0].mxu0
        %v862 = vadd.f32 0.0, %v861
        %863 = vmatprep.mubr.bf16.mxu0 %v628
        %864 = vmatmul.mubr.bf16.gmra.mrb[0].mxu0 %v627
        %v865 = vpop.f32.mrb[0].mxu0
        %v866 = vadd.f32 0.0, %v865
        %v867 = vpop.f32.mrb[0].mxu0
        %v868 = vadd.f32 0.0, %v867
        %v869 = vpop.f32.mrb[0].mxu0
        %v870 = vadd.f32 0.0, %v869
        %v871 = vpop.f32.mrb[0].mxu0
        %v872 = vadd.f32 0.0, %v871
        %873 = vdwg.mxu0
        %v874 = vadd.f32 %v609, %v856
        %v875 = vadd.f32 %v610, %v858
        %v876 = vadd.f32 %v611, %v860
        %v877 = vadd.f32 %v612, %v862
        %v878 = vadd.f32 %v613, %v866
        %v879 = vadd.f32 %v614, %v868
        %v880 = vadd.f32 %v615, %v870
        %v881 = vadd.f32 %v616, %v872
        %882 = vst [vmem:[%s608] sm:$0xff] %v874
        %883 = vst [vmem:[%s608 + $0x8] sm:$0xff] %v875
        %884 = vst [vmem:[%s608 + $0x10] sm:$0xff] %v876
        %885 = vst [vmem:[%s608 + $0x18] sm:$0xff] %v877
        %886 = vst [vmem:[%s608 + $0x20] sm:$0xff] %v878
        %887 = vst [vmem:[%s608 + $0x28] sm:$0xff] %v879
        %888 = vst [vmem:[%s608 + $0x30] sm:$0xff] %v880
        %889 = vst [vmem:[%s608 + $0x38] sm:$0xff] %v881
        // Predicated region
        $region53: #{tpu_custom_call.1} parent=35 // pred_check
          %p890 = pneg %p307
        $region54: #{tpu_custom_call.1} parent=35 // pred_check_branch
          %892 = sbr.rel (%p890) target = $region56
        $region55: #{tpu_custom_call.1} parent=35 // pred_region
          %v893 = vld [vmem:[#allocation2] sm:$0xff]
          %v894 = vld [vmem:[#allocation2 + $0x8] sm:$0xff]
          %v895 = vld [vmem:[#allocation2 + $0x10] sm:$0xff]
          %v896 = vld [vmem:[#allocation2 + $0x18] sm:$0xff]
          %v897 = vld [vmem:[#allocation2 + $0x20] sm:$0xff]
          %v898 = vld [vmem:[#allocation2 + $0x28] sm:$0xff]
          %v899 = vld [vmem:[#allocation2 + $0x30] sm:$0xff]
          %v900 = vld [vmem:[#allocation2 + $0x38] sm:$0xff]
          %v901 = vld [vmem:[#allocation2 + $0x40] sm:$0xff]
          %v902 = vld [vmem:[#allocation2 + $0x48] sm:$0xff]
          %v903 = vld [vmem:[#allocation2 + $0x50] sm:$0xff]
          %v904 = vld [vmem:[#allocation2 + $0x58] sm:$0xff]
          %v905 = vld [vmem:[#allocation2 + $0x60] sm:$0xff]
          %v906 = vld [vmem:[#allocation2 + $0x68] sm:$0xff]
          %v907 = vld [vmem:[#allocation2 + $0x70] sm:$0xff]
          %v908 = vld [vmem:[#allocation2 + $0x78] sm:$0xff]
          %v909 = vld [vmem:[%s3] sm:$0x3]
          %v911 = vlaneseq
          %v912 = vshrl.u32 %v911, 7
          %v913 = vsub.s32 0, %v912
          %v914 = vrot.slane %v909, %v913
          %v915 = vlaneseq
          %v916 = vshrl.u32 %v915, 7
          %v917 = vsub.s32 1, %v916
          %v918 = vrot.slane %v909, %v917
          %v921 = vadd.f32 %v893, %v914
          %v922 = vadd.f32 %v894, %v918
          %v923 = vadd.f32 %v895, %v914
          %v924 = vadd.f32 %v896, %v918
          %v925 = vadd.f32 %v897, %v914
          %v926 = vadd.f32 %v898, %v918
          %v927 = vadd.f32 %v899, %v914
          %v928 = vadd.f32 %v900, %v918
          %v929 = vadd.f32 %v901, %v914
          %v930 = vadd.f32 %v902, %v918
          %v931 = vadd.f32 %v903, %v914
          %v932 = vadd.f32 %v904, %v918
          %v933 = vadd.f32 %v905, %v914
          %v934 = vadd.f32 %v906, %v918
          %v935 = vadd.f32 %v907, %v914
          %v936 = vadd.f32 %v908, %v918
          %v937 = vmul.f32 %v921, %v921
          %v938 = vmul.f32 %v922, %v922
          %v939 = vmul.f32 %v923, %v923
          %v940 = vmul.f32 %v924, %v924
          %v941 = vmul.f32 %v925, %v925
          %v942 = vmul.f32 %v926, %v926
          %v943 = vmul.f32 %v927, %v927
          %v944 = vmul.f32 %v928, %v928
          %v945 = vmul.f32 %v929, %v929
          %v946 = vmul.f32 %v930, %v930
          %v947 = vmul.f32 %v931, %v931
          %v948 = vmul.f32 %v932, %v932
          %v949 = vmul.f32 %v933, %v933
          %v950 = vmul.f32 %v934, %v934
          %v951 = vmul.f32 %v935, %v935
          %v952 = vmul.f32 %v936, %v936
          %v953 = vadd.f32 %v937, %v938
          %954 = vadd.xlane.f32.xlu0 %v953
          %v955 = vpop.xlane.xlu0 %954
          %v956 = vadd.f32 %v939, %v940
          %957 = vadd.xlane.f32.xlu0 %v956
          %v958 = vpop.xlane.xlu0 %957
          %v959 = vadd.f32 %v941, %v942
          %960 = vadd.xlane.f32.xlu0 %v959
          %v961 = vpop.xlane.xlu0 %960
          %v962 = vadd.f32 %v943, %v944
          %963 = vadd.xlane.f32.xlu0 %v962
          %v964 = vpop.xlane.xlu0 %963
          %v965 = vadd.f32 %v945, %v946
          %966 = vadd.xlane.f32.xlu0 %v965
          %v967 = vpop.xlane.xlu0 %966
          %v968 = vadd.f32 %v947, %v948
          %969 = vadd.xlane.f32.xlu0 %v968
          %v970 = vpop.xlane.xlu0 %969
          %v971 = vadd.f32 %v949, %v950
          %972 = vadd.xlane.f32.xlu0 %v971
          %v973 = vpop.xlane.xlu0 %972
          %v974 = vadd.f32 %v951, %v952
          %975 = vadd.xlane.f32.xlu0 %v974
          %v976 = vpop.xlane.xlu0 %975
          %v977 = vmax.f32 %v955, 1e-24
          %v978 = vmax.f32 %v958, 1e-24
          %v979 = vmax.f32 %v961, 1e-24
          %v980 = vmax.f32 %v964, 1e-24
          %v981 = vmax.f32 %v967, 1e-24
          %v982 = vmax.f32 %v970, 1e-24
          %v983 = vmax.f32 %v973, 1e-24
          %v984 = vmax.f32 %v976, 1e-24
          %v985 = vrsqrt.pop %v977
          %v986 = vrsqrt.pop %v978
          %v987 = vrsqrt.pop %v979
          %v988 = vrsqrt.pop %v980
          %v989 = vrsqrt.pop %v981
          %v990 = vrsqrt.pop %v982
          %v991 = vrsqrt.pop %v983
          %v992 = vrsqrt.pop %v984
          %v993 = vmul.f32 %v921, %v985
          %v994 = vmul.f32 %v922, %v985
          %v995 = vmul.f32 %v923, %v986
          %v996 = vmul.f32 %v924, %v986
          %v997 = vmul.f32 %v925, %v987
          %v998 = vmul.f32 %v926, %v987
          %v999 = vmul.f32 %v927, %v988
          %v1000 = vmul.f32 %v928, %v988
          %v1001 = vmul.f32 %v929, %v989
          %v1002 = vmul.f32 %v930, %v989
          %v1003 = vmul.f32 %v931, %v990
          %v1004 = vmul.f32 %v932, %v990
          %v1005 = vmul.f32 %v933, %v991
          %v1006 = vmul.f32 %v934, %v991
          %v1007 = vmul.f32 %v935, %v992
          %v1008 = vmul.f32 %v936, %v992
          %v1009 = vsub.f32 %v993, %v1001
          %v1010 = vsub.f32 %v994, %v1002
          %v1011 = vsub.f32 %v995, %v1003
          %v1012 = vsub.f32 %v996, %v1004
          %v1013 = vsub.f32 %v997, %v1005
          %v1014 = vsub.f32 %v998, %v1006
          %v1015 = vsub.f32 %v999, %v1007
          %v1016 = vsub.f32 %v1000, %v1008
          %v1017 = vmul.f32 %v1009, %v1009
          %v1018 = vmul.f32 %v1010, %v1010
          %v1019 = vmul.f32 %v1011, %v1011
          %v1020 = vmul.f32 %v1012, %v1012
          %v1021 = vmul.f32 %v1013, %v1013
          %v1022 = vmul.f32 %v1014, %v1014
          %v1023 = vmul.f32 %v1015, %v1015
          %v1024 = vmul.f32 %v1016, %v1016
          %v1025 = vadd.f32 %v1017, %v1018
          %1026 = vadd.xlane.f32.xlu0 %v1025
          %v1027 = vpop.xlane.xlu0 %1026
          %v1028 = vadd.f32 %v1019, %v1020
          %1029 = vadd.xlane.f32.xlu0 %v1028
          %v1030 = vpop.xlane.xlu0 %1029
          %v1031 = vadd.f32 %v1021, %v1022
          %1032 = vadd.xlane.f32.xlu0 %v1031
          %v1033 = vpop.xlane.xlu0 %1032
          %v1034 = vadd.f32 %v1023, %v1024
          %1035 = vadd.xlane.f32.xlu0 %v1034
          %v1036 = vpop.xlane.xlu0 %1035
          %v1037 = vmax.f32 %v1027, 1e-24
          %v1038 = vmax.f32 %v1030, 1e-24
          %v1039 = vmax.f32 %v1033, 1e-24
          %v1040 = vmax.f32 %v1036, 1e-24
          %v1041 = vrsqrt.pop %v1037
          %v1042 = vrsqrt.pop %v1038
          %v1043 = vrsqrt.pop %v1039
          %v1044 = vrsqrt.pop %v1040
          %v1045 = vmul.f32 %v1009, %v1041
          %v1046 = vmul.f32 %v1010, %v1041
          %v1047 = vmul.f32 %v1011, %v1042
          %v1048 = vmul.f32 %v1012, %v1042
          %v1049 = vmul.f32 %v1013, %v1043
          %v1050 = vmul.f32 %v1014, %v1043
          %v1051 = vmul.f32 %v1015, %v1044
          %v1052 = vmul.f32 %v1016, %v1044
          %v1053 = vadd.f32 %v1045, 1.0
          %v1054 = vadd.f32 %v1046, 1.0
          %v1055 = vadd.f32 %v1047, 1.0
          %v1056 = vadd.f32 %v1048, 1.0
          %v1057 = vadd.f32 %v1049, 1.0
          %v1058 = vadd.f32 %v1050, 1.0
          %v1059 = vadd.f32 %v1051, 1.0
          %v1060 = vadd.f32 %v1052, 1.0
          %v1061 = vrcp.pop %v1053
          %v1062 = vrcp.pop %v1054
          %v1063 = vrcp.pop %v1055
          %v1064 = vrcp.pop %v1056
          %v1065 = vrcp.pop %v1057
          %v1066 = vrcp.pop %v1058
          %v1067 = vrcp.pop %v1059
          %v1068 = vrcp.pop %v1060
          %v1069 = vmul.f32 %v1053, %v1061
          %v1070 = vmul.f32 %v1054, %v1062
          %v1071 = vmul.f32 %v1055, %v1063
          %v1072 = vmul.f32 %v1056, %v1064
          %v1073 = vmul.f32 %v1057, %v1065
          %v1074 = vmul.f32 %v1058, %v1066
          %v1075 = vmul.f32 %v1059, %v1067
          %v1076 = vmul.f32 %v1060, %v1068
          %v1077 = vsub.f32 2.0, %v1069
          %v1078 = vsub.f32 2.0, %v1070
          %v1079 = vsub.f32 2.0, %v1071
          %v1080 = vsub.f32 2.0, %v1072
          %v1081 = vsub.f32 2.0, %v1073
          %v1082 = vsub.f32 2.0, %v1074
          %v1083 = vsub.f32 2.0, %v1075
          %v1084 = vsub.f32 2.0, %v1076
          %v1085 = vmul.f32 %v1061, %v1077
          %v1086 = vmul.f32 %v1062, %v1078
          %v1087 = vmul.f32 %v1063, %v1079
          %v1088 = vmul.f32 %v1064, %v1080
          %v1089 = vmul.f32 %v1065, %v1081
          %v1090 = vmul.f32 %v1066, %v1082
          %v1091 = vmul.f32 %v1067, %v1083
          %v1092 = vmul.f32 %v1068, %v1084
          %1093 = vst [vmem:[%s300] sm:$0xff] %v1085
          %1094 = vst [vmem:[%s300 + $0x8] sm:$0xff] %v1086
          %1095 = vst [vmem:[%s300 + $0x10] sm:$0xff] %v1087
          %1096 = vst [vmem:[%s300 + $0x18] sm:$0xff] %v1088
          %1097 = vst [vmem:[%s300 + $0x20] sm:$0xff] %v1089
          %1098 = vst [vmem:[%s300 + $0x28] sm:$0xff] %v1090
          %1099 = vst [vmem:[%s300 + $0x30] sm:$0xff] %v1091
          %1100 = vst [vmem:[%s300 + $0x38] sm:$0xff] %v1092
        $region56: #{tpu_custom_call.1} parent=35 // pred_fallthru
          _
        %s1101 = sand.u32 %s147, 1
        %s1102 = scalar_lea.sflag [#allocation5], %s1101
        %s1103 = sand.u32 %s147, 1
        %s1104 = smul.addr %s1103, 64
        %s1105 = scalar_lea.vmem [#allocation9], %s1104
        // Predicated region
        $region57: #{tpu_custom_call.1} parent=35 // pred_check
          %p1106 = pneg %p157
        $region58: #{tpu_custom_call.1} parent=35 // pred_check_branch
          %1108 = sbr.rel (%p1106) target = $region60
        $region59: #{tpu_custom_call.1} parent=35 // pred_region
          %s1109 = smul.u32 4, %s28
          %s1111 = ssub.s32 1024, 1024
          %1112 = vsyncadd %s1102, %s1111
          %s1113 = smul.addr %s1109, 2
          %s1114 = smul.addr %s1113, 128
          %s1115 = scalar_lea.hbm %s4, %s1114
          %s1116 = sshll.u32 %s1105, 4
          %s1117 = int_to_ptr.vmem [resolvable:$true] %s1116
          %1122 = dma.vmem_to_hbm [thread:$0]  %s1117, 1024, %s1115, %s1102, 256, 256, 16
        $region60: #{tpu_custom_call.1} parent=35 // pred_fallthru
          _
      $region36: #{tpu_custom_call.1} parent=5 // pred_fallthru
        _
      %p1123 = scmp.le.s32.totalorder 2, %s19
      // Predicated region
      $region61: #{tpu_custom_call.1} parent=5 // pred_check
        %p1124 = pneg %p1123
      $region62: #{tpu_custom_call.1} parent=5 // pred_check_branch
        %1126 = sbr.rel (%p1124) target = $region64
      $region63: #{tpu_custom_call.1} parent=5 // pred_region
        %s1127 = ssub.s32 %s19, 2
        // Predicated region
        $region65: #{tpu_custom_call.1} parent=63 // pred_check
          %p1128 = pneg %p163
        $region66: #{tpu_custom_call.1} parent=63 // pred_check_branch
          %1130 = sbr.rel (%p1128) target = $region68
        $region67: #{tpu_custom_call.1} parent=63 // pred_region
          %s1131 = sand.u32 %s148, 1
          %s1132 = scalar_lea.sflag [#allocation5], %s1131
          %s1133 = sand.u32 %s148, 1
          %s1134 = smul.addr %s1133, 64
          %s1135 = scalar_lea.vmem [#allocation9], %s1134
          %1136 = dma.done %s1132, 1024
        $region68: #{tpu_custom_call.1} parent=63 // pred_fallthru
          _
      $region64: #{tpu_custom_call.1} parent=5 // pred_fallthru
        _
    $region6: #{tpu_custom_call.1} parent=1 // loop_footer
      %s23 = sadd.s32 1, %s19
    $region7: #{tpu_custom_call.1} parent=1 // loop_footer_branch
      %18 = sbr.rel target = $region3
    $region8: #{tpu_custom_call.1} parent=1 // loop_exit
      _
    %1137 = vsyncpa [#allocation4], 1
    %s1138 = scalar_lea.sflag [#allocation4], 1
    %1139 = vsyncpa %s1138, 1
    %1140 = vsyncpa [#allocation7], 1
    %s1141 = scalar_lea.sflag [#allocation7], 1
    %1142 = vsyncpa %s1141, 1
    %1143 = vsyncpa [#allocation5], 1
    %s1144 = scalar_lea.sflag [#allocation5], 1
    %1145 = vsyncpa %s1144, 1

</llo_original>
